<compile_context>
chip_gen: v6e
topology: v6e:2x2x1
jax: 0.10.0
libtpu: 0.0.40
codegen_flags: <defaults>
</compile_context>

<pallas_src>
import functools
import math

import jax
import jax.numpy as jnp
from jax.experimental import pallas as pl
from jax.experimental.pallas import tpu as pltpu

D_EMB = 512     # dim_changer output dim == CLIP embedding dim
C_FEAT = 128    # per-level feature channels fed into dim_changer
C_AUG = 136     # 128 feature rows + 1 constant "ones" row (bias), padded to a multiple of 8
EPS = 1e-12     # F.normalize-style epsilon


def _round_up(x, m):
    return (x + m - 1) // m * m


def _pick_tile(n_min_padded):
    """Largest point tile (multiple of 128, capped at 2048) not exceeding the
    128-padded size of the smallest level, so no level wastes whole tiles."""
    for t in (2048, 1024, 512, 256, 128):
        if t <= n_min_padded:
            return t
    return 128


# ----------------------------------------------------------------------------
# Fused Pallas kernel: one (batch, point-tile) step of the whole head
# ----------------------------------------------------------------------------
def _fused_head_kernel(lvl_ref, sv2t_ref, st2v_ref, x_ref, s_ref,
                       v2t_ref, t2v_ref, *, k, c_aug):
    """x_ref : [C_AUG, TN]          bf16  (rows 0:128 features, row 128 = 1.0)
       s_ref : [C_AUG+K_pad, C_AUG] bf16  per-level stacked operand [G_aug ; M_aug]
                 G_aug = W_aug^T W_aug,  M_aug = text_n^T W_aug,  W_aug = [W | b]
       One matmul yields both ||Wx+b||^2 (via x . Gx) and the cosine logits;
       the [512, TN] intermediate of the naive formulation never exists."""
    lvl = lvl_ref[pl.program_id(1)]

    x = x_ref[...]                                                    # [C_AUG, TN] bf16
    p = jnp.dot(s_ref[...], x, preferred_element_type=jnp.float32)    # [C_AUG+K_pad, TN]

    gx = p[:c_aug, :]                                                 # [C_AUG, TN]
    mx = p[c_aug:c_aug + k, :]                                        # [K, TN] = text_n^T (Wx+b)

    # ||Wx + b||^2 = x_aug^T G_aug x_aug  (clamp: bf16 Gram can be eps-negative)
    sq = jnp.sum(x.astype(jnp.float32) * gx, axis=0, keepdims=True)   # [1, TN]
    inv_norm = jax.lax.rsqrt(jnp.maximum(sq, 0.0) + EPS)
    logits = mx * inv_norm                                            # [K, TN] cosine logits

    # v2t: log_softmax over the class (sublane) axis, stored lane-dense [K, TN]
    z = sv2t_ref[lvl] * logits
    z = z - jnp.max(z, axis=0, keepdims=True)
    v2t_ref[...] = z - jnp.log(jnp.sum(jnp.exp(z), axis=0, keepdims=True))

    # t2v: the softmax over ALL points of the batch is finished in the wrapper;
    # store the scaled logits lane-dense [K, TN].
    t2v_ref[...] = st2v_ref[lvl] * logits


# ----------------------------------------------------------------------------
# Wrapper: one pallas_call for all three levels
# ----------------------------------------------------------------------------
def afford3d_head(feats, ws, bs, text_features, scales_v2t, scales_t2v):
    """feats: list of [B, 128, n_l] f32; ws: list of [512,128]; bs: list of [512];
    text_features: [512, K]; scales_*: [n_levels] f32 raw logit_scale params.
    Returns (v2ts, t2vs): v2ts[l] = [B, K, n_l] log-probs, t2vs[l] = [B*n_l, K]."""
    n_levels = len(feats)
    B = feats[0].shape[0]
    K = text_features.shape[1]
    k_pad = _round_up(K, 8)

    n_list = [int(f.shape[-1]) for f in feats]
    tn = _pick_tile(_round_up(min(n_list), 128))
    n_pad_list = [_round_up(n, tn) for n in n_list]
    tiles_per_level = [p // tn for p in n_pad_list]
    n_tiles = sum(tiles_per_level)
    offsets = [0]
    for p_ in n_pad_list:
        offsets.append(offsets[-1] + p_)
    n_tot = offsets[-1]

    # Per-tile level id (scalar-prefetched into SMEM; drives the S index_map
    # and the per-level scale lookup inside the kernel).
    lvl_ids = []
    for lev, t in enumerate(tiles_per_level):
        lvl_ids.extend([lev] * t)
    lvl_ids = jnp.asarray(lvl_ids, dtype=jnp.int32)

    # Augmented, padded, concatenated features: rows 0:128 = features, row 128 = 1.
    x_parts = []
    for f, n, npad in zip(feats, n_list, n_pad_list):
        x = jnp.zeros((B, C_AUG, npad), jnp.float32)
        x = x.at[:, :C_FEAT, :n].set(f)
        x = x.at[:, C_FEAT, :].set(1.0)
        x_parts.append(x)
    x_cat = jnp.concatenate(x_parts, axis=-1).astype(jnp.bfloat16)     # [B, C_AUG, n_tot]

    # Text normalized ONCE over dim=0 (as in the reference), in f32.
    t = text_features
    t_n = t * jax.lax.rsqrt(jnp.sum(t * t, axis=0, keepdims=True) + EPS)   # [512, K]

    # Per-level stacked operand S = [G_aug ; M_aug], precomputed in f32, shipped bf16.
    s_blocks = []
    for w, b in zip(ws, bs):
        w_aug = jnp.zeros((D_EMB, C_AUG), jnp.float32)
        w_aug = w_aug.at[:, :C_FEAT].set(w)
        w_aug = w_aug.at[:, C_FEAT].set(b)
        g_aug = jnp.dot(w_aug.T, w_aug)                                 # [C_AUG, C_AUG]
        m_aug = jnp.zeros((k_pad, C_AUG), jnp.float32)
        m_aug = m_aug.at[:K].set(jnp.dot(t_n.T, w_aug))                 # [K_pad, C_AUG]
        s_blocks.append(jnp.concatenate([g_aug, m_aug], axis=0))
    s_stack = jnp.stack(s_blocks, axis=0).astype(jnp.bfloat16)          # [L, C_AUG+K_pad, C_AUG]

    sv2t = jnp.asarray(scales_v2t, jnp.float32).reshape(n_levels)
    st2v = jnp.asarray(scales_t2v, jnp.float32).reshape(n_levels)

    kernel = functools.partial(_fused_head_kernel, k=K, c_aug=C_AUG)

    v2t_cat, t2v_cat = pl.pallas_call(
        kernel,
        out_shape=(jax.ShapeDtypeStruct((B, K, n_tot), jnp.float32),
                   jax.ShapeDtypeStruct((B, K, n_tot), jnp.float32)),
        grid_spec=pltpu.PrefetchScalarGridSpec(
            num_scalar_prefetch=1,                                      # lvl_ids
            grid=(B, n_tiles),
            in_specs=[
                pl.BlockSpec(memory_space=pltpu.MemorySpace.SMEM),      # logit_scale  (v2t) [L]
                pl.BlockSpec(memory_space=pltpu.MemorySpace.SMEM),      # logit_scale_ (t2v) [L]
                pl.BlockSpec((pl.Squeezed(), C_AUG, tn),
                             lambda b, j, lvl: (b, 0, j)),               # augmented features
                pl.BlockSpec((pl.Squeezed(), C_AUG + k_pad, C_AUG),
                             lambda b, j, lvl: (lvl[j], 0, 0)),          # per-level [G;M] operand
            ],
            out_specs=(
                pl.BlockSpec((pl.Squeezed(), K, tn), lambda b, j, lvl: (b, 0, j)),   # v2t
                pl.BlockSpec((pl.Squeezed(), K, tn), lambda b, j, lvl: (b, 0, j)),   # t2v logits
            ),
        ),
        compiler_params=pltpu.CompilerParams(
            dimension_semantics=("parallel", "parallel")),
    )(lvl_ids, sv2t, st2v, x_cat, s_stack)

    v2ts, t2vs = [], []
    for lev in range(n_levels):
        off, n = offsets[lev], n_list[lev]
        v2ts.append(v2t_cat[:, :, off:off + n])                          # [B, K, n_l]
        scaled = t2v_cat[:, :, off:off + n]                              # [B, K, n_l]
        # t2v: softmax over ALL points of the batch (dim=0 of [B*n_l, K]); tiny
        # reduction done in plain XLA on the lane-dense tensor (no extra launch),
        # then reshaped to the PyTorch layout.
        m = jnp.max(scaled, axis=(0, 2), keepdims=True)
        e = jnp.exp(scaled - m)
        p = e / jnp.sum(e, axis=(0, 2), keepdims=True)
        t2vs.append(p.transpose(0, 2, 1).reshape(-1, K))
    return v2ts, t2vs


# ----------------------------------------------------------------------------
# Parameters (deterministic, synthetic)
# ----------------------------------------------------------------------------
def init_params(key, num_classes):
    ks = jax.random.split(key, 8)
    scale_init = math.log(1.0 / 0.07)
    return {
        "dim_changer_w": [0.05 * jax.random.normal(ks[i], (D_EMB, C_FEAT), jnp.float32)
                          for i in range(3)],
        "dim_changer_b": [0.01 * jax.random.normal(ks[3 + i], (D_EMB,), jnp.float32)
                          for i in range(3)],
        # NOTE: the reference multiplies by the raw logit_scale parameter (no .exp()),
        # so we do the same.
        "logit_scales": jnp.full((3,), scale_init, jnp.float32),
        "logit_scales_": jnp.full((3,), scale_init, jnp.float32),
        # TODO(synk): CLIP text encoder not available; synthetic deterministic [512, K].
        "text_features": jax.random.normal(ks[6], (D_EMB, num_classes), jnp.float32),
        # TODO(synk): stand-in projections for the PointNet++ backbone outputs.
        "stub_proj": [0.5 * jax.random.normal(jax.random.fold_in(ks[7], i),
                                              (C_FEAT, 3), jnp.float32)
                      for i in range(3)],
    }


# ----------------------------------------------------------------------------
# Forward pass (glue in JAX, hot path in a single Pallas launch)
# ----------------------------------------------------------------------------
def afford3d_forward(params, xyz):
    B, _, N = xyz.shape
    n1, n2 = N // 2, N // 4

    # --- backbone stub (see TODO at top): produces [B, 128, N_l] per level ---
    l1_xyz = xyz[:, :, ::2]
    l2_xyz = xyz[:, :, ::4]
    l0_feat = jnp.tanh(jnp.einsum("dc,bcn->bdn", params["stub_proj"][0], xyz))
    l1_feat = jnp.tanh(jnp.einsum("dc,bcn->bdn", params["stub_proj"][1], l1_xyz))
    l2_feat = jnp.tanh(jnp.einsum("dc,bcn->bdn", params["stub_proj"][2], l2_xyz))

    # idxes: l0 exactly as in the reference; l1/l2 are stand-ins for SA group idxes.
    l0_idxes = [jnp.broadcast_to(jnp.arange(N, dtype=jnp.int32), (B, N))[..., None]]
    l1_idxes = [jnp.broadcast_to(jnp.arange(0, N, 2, dtype=jnp.int32), (B, n1))[..., None]]
    l2_idxes = [jnp.broadcast_to(jnp.arange(0, N, 4, dtype=jnp.int32), (B, n2))[..., None]]

    v2ts, t2vs = afford3d_head(
        [l0_feat, l1_feat, l2_feat],
        params["dim_changer_w"],
        params["dim_changer_b"],
        params["text_features"],
        params["logit_scales"],
        params["logit_scales_"],
    )
    return v2ts, t2vs, [l0_idxes, l1_idxes, l2_idxes]


if __name__ == "__main__":
    key = jax.random.PRNGKey(0)
    k_xyz, k_params = jax.random.split(key)

    B, N = 2, 16          # small shapes; model levels: N, N/2, N/4 points
    num_classes = 5       # synthetic affordance vocabulary size

    xyz = jax.random.normal(k_xyz, (B, 3, N), jnp.float32)
    params = init_params(k_params, num_classes)

    fwd = jax.jit(afford3d_forward)
    v2ts, t2vs, idxes = fwd(params, xyz)
    jax.block_until_ready((v2ts, t2vs))

    assert v2ts[0].shape == (B, num_classes, N)
    assert v2ts[1].shape == (B, num_classes, N // 2)
    assert v2ts[2].shape == (B, num_classes, N // 4)
    assert t2vs[0].shape == (B * N, num_classes)
    assert t2vs[1].shape == (B * (N // 2), num_classes)
    assert idxes[0][0].shape == (B, N, 1)

    print("KERNEL_OK")
</pallas_src>

<mosaic_0001>
module attributes {stable_mosaic.version = 11 : i64} {
  func.func @_fused_head_kernel(%arg0: i32, %arg1: i32, %arg2: memref<3xi32, #tpu.memory_space<smem>>, %arg3: memref<3xf32, #tpu.memory_space<smem>>, %arg4: memref<3xf32, #tpu.memory_space<smem>>, %arg5: memref<1x136x128xbf16, #tpu.memory_space<vmem>>, %arg6: memref<1x144x136xbf16, #tpu.memory_space<vmem>>, %arg7: memref<1x5x128xf32, #tpu.memory_space<vmem>>, %arg8: memref<1x5x128xf32, #tpu.memory_space<vmem>>) attributes {dimension_semantics = [#tpu.dimension_semantics<parallel>, #tpu.dimension_semantics<parallel>], iteration_bounds = array<i64: 2, 3>, scalar_prefetch = 1 : i64, scratch_operands = 0 : i64, tpu.core_type = #tpu.core_type<tc>, window_params = [{transform_indices = @transform_0, window_bounds = array<i64: 3>}, {transform_indices = @transform_1, window_bounds = array<i64: 3>}, {transform_indices = @transform_2, window_bounds = array<i64: 1, 136, 128>}, {transform_indices = @transform_3, window_bounds = array<i64: 1, 144, 136>}, {transform_indices = @transform_4, window_bounds = array<i64: 1, 5, 128>}, {transform_indices = @transform_5, window_bounds = array<i64: 1, 5, 128>}]} {
    %0 = arith.index_cast %arg1 : i32 to index
    %1 = memref.load %arg2[%0] : memref<3xi32, #tpu.memory_space<smem>>
    %c0 = arith.constant 0 : index
    %c0_0 = arith.constant 0 : index
    %c0_1 = arith.constant 0 : index
    %2 = vector.load %arg5[%c0, %c0_0, %c0_1] : memref<1x136x128xbf16, #tpu.memory_space<vmem>>, vector<1x136x128xbf16>
    %3 = vector.shape_cast %2 : vector<1x136x128xbf16> to vector<136x128xbf16>
    %c0_2 = arith.constant 0 : index
    %c0_3 = arith.constant 0 : index
    %c0_4 = arith.constant 0 : index
    %4 = vector.load %arg6[%c0_2, %c0_3, %c0_4] : memref<1x144x136xbf16, #tpu.memory_space<vmem>>, vector<1x144x136xbf16>
    %5 = vector.shape_cast %4 : vector<1x144x136xbf16> to vector<144x136xbf16>
    %cst = arith.constant dense<0.000000e+00> : vector<144x128xf32>
    %6 = tpu.matmul %5, %3, %cst {dimension_numbers = #tpu.dot_dimension_numbers<[1], [0], [0], [1], [0, 0, 1, 1], [], []>} : vector<144x136xbf16>, vector<136x128xbf16>, vector<144x128xf32> -> vector<144x128xf32>
    %7 = vector.extract_strided_slice %6 {offsets = [0, 0], sizes = [136, 128], strides = [1, 1]} : vector<144x128xf32> to vector<136x128xf32>
    %8 = vector.extract_strided_slice %6 {offsets = [136, 0], sizes = [5, 128], strides = [1, 1]} : vector<144x128xf32> to vector<5x128xf32>
    %9 = arith.extf %3 : vector<136x128xbf16> to vector<136x128xf32>
    %10 = arith.mulf %9, %7 : vector<136x128xf32>
    %cst_5 = arith.constant dense<0.000000e+00> : vector<128xf32>
    %11 = vector.multi_reduction <add>, %10, %cst_5 [0] : vector<136x128xf32> to vector<128xf32>
    %12 = vector.shape_cast %11 : vector<128xf32> to vector<1x128xf32>
    %cst_6 = arith.constant 0.000000e+00 : f32
    %13 = vector.broadcast %cst_6 : f32 to vector<1x128xf32>
    %14 = arith.maximumf %12, %13 : vector<1x128xf32>
    %cst_7 = arith.constant 9.99999996E-13 : f32
    %15 = vector.broadcast %cst_7 : f32 to vector<1x128xf32>
    %16 = arith.addf %14, %15 : vector<1x128xf32>
    %17 = math.rsqrt %16 : vector<1x128xf32>
    %18 = vector.broadcast %17 : vector<1x128xf32> to vector<5x128xf32>
    %19 = arith.mulf %8, %18 : vector<5x128xf32>
    %20 = arith.index_cast %1 : i32 to index
    %21 = memref.load %arg3[%20] : memref<3xf32, #tpu.memory_space<smem>>
    %22 = vector.broadcast %21 : f32 to vector<5x128xf32>
    %23 = arith.mulf %22, %19 : vector<5x128xf32>
    %cst_8 = arith.constant dense<0xFF800000> : vector<128xf32>
    %24 = vector.multi_reduction <maximumf>, %23, %cst_8 [0] : vector<5x128xf32> to vector<128xf32>
    %25 = vector.shape_cast %24 : vector<128xf32> to vector<1x128xf32>
    %26 = vector.broadcast %25 : vector<1x128xf32> to vector<5x128xf32>
    %27 = arith.subf %23, %26 : vector<5x128xf32>
    %28 = math.exp %27 : vector<5x128xf32>
    %cst_9 = arith.constant dense<0.000000e+00> : vector<128xf32>
    %29 = vector.multi_reduction <add>, %28, %cst_9 [0] : vector<5x128xf32> to vector<128xf32>
    %30 = vector.shape_cast %29 : vector<128xf32> to vector<1x128xf32>
    %31 = math.log %30 : vector<1x128xf32>
    %32 = vector.broadcast %31 : vector<1x128xf32> to vector<5x128xf32>
    %33 = arith.subf %27, %32 : vector<5x128xf32>
    %c0_10 = arith.constant 0 : index
    %c0_11 = arith.constant 0 : index
    %c0_12 = arith.constant 0 : index
    %34 = vector.load %arg7[%c0_10, %c0_11, %c0_12] : memref<1x5x128xf32, #tpu.memory_space<vmem>>, vector<1x5x128xf32>
    %35 = vector.shape_cast %34 : vector<1x5x128xf32> to vector<5x128xf32>
    %36 = vector.shape_cast %33 : vector<5x128xf32> to vector<1x5x128xf32>
    tpu.vector_store %arg7[%c0_10, %c0_11, %c0_12], %36 {strides = array<i32>} : memref<1x5x128xf32, #tpu.memory_space<vmem>>, vector<1x5x128xf32>,
    %37 = arith.index_cast %1 : i32 to index
    %38 = memref.load %arg4[%37] : memref<3xf32, #tpu.memory_space<smem>>
    %39 = vector.broadcast %38 : f32 to vector<5x128xf32>
    %40 = arith.mulf %39, %19 : vector<5x128xf32>
    %c0_13 = arith.constant 0 : index
    %c0_14 = arith.constant 0 : index
    %c0_15 = arith.constant 0 : index
    %41 = vector.load %arg8[%c0_13, %c0_14, %c0_15] : memref<1x5x128xf32, #tpu.memory_space<vmem>>, vector<1x5x128xf32>
    %42 = vector.shape_cast %41 : vector<1x5x128xf32> to vector<5x128xf32>
    %43 = vector.shape_cast %40 : vector<5x128xf32> to vector<1x5x128xf32>
    tpu.vector_store %arg8[%c0_13, %c0_14, %c0_15], %43 {strides = array<i32>} : memref<1x5x128xf32, #tpu.memory_space<vmem>>, vector<1x5x128xf32>,
    return
  }
  func.func @transform_0(%arg0: i32, %arg1: i32, %arg2: memref<3xi32, #tpu.memory_space<smem>>) -> i32 {
    %c0_i32 = arith.constant 0 : i32
    %c0_i32_0 = arith.constant 0 : i32
    return %c0_i32 : i32
  }
  func.func @transform_1(%arg0: i32, %arg1: i32, %arg2: memref<3xi32, #tpu.memory_space<smem>>) -> i32 {
    %c0_i32 = arith.constant 0 : i32
    %c0_i32_0 = arith.constant 0 : i32
    return %c0_i32 : i32
  }
  func.func @transform_2(%arg0: i32, %arg1: i32, %arg2: memref<3xi32, #tpu.memory_space<smem>>) -> (i32, i32, i32) {
    %c0_i32 = arith.constant 0 : i32
    %c0_i32_0 = arith.constant 0 : i32
    return %arg0, %c0_i32, %arg1 : i32, i32, i32
  }
  func.func @transform_3(%arg0: i32, %arg1: i32, %arg2: memref<3xi32, #tpu.memory_space<smem>>) -> (i32, i32, i32) {
    %0 = arith.index_cast %arg1 : i32 to index
    %1 = memref.load %arg2[%0] : memref<3xi32, #tpu.memory_space<smem>>
    %c0_i32 = arith.constant 0 : i32
    %c0_i32_0 = arith.constant 0 : i32
    %c0_i32_1 = arith.constant 0 : i32
    return %1, %c0_i32, %c0_i32_0 : i32, i32, i32
  }
  func.func @transform_4(%arg0: i32, %arg1: i32, %arg2: memref<3xi32, #tpu.memory_space<smem>>) -> (i32, i32, i32) {
    %c0_i32 = arith.constant 0 : i32
    %c0_i32_0 = arith.constant 0 : i32
    return %arg0, %c0_i32, %arg1 : i32, i32, i32
  }
  func.func @transform_5(%arg0: i32, %arg1: i32, %arg2: memref<3xi32, #tpu.memory_space<smem>>) -> (i32, i32, i32) {
    %c0_i32 = arith.constant 0 : i32
    %c0_i32_0 = arith.constant 0 : i32
    return %arg0, %c0_i32, %arg1 : i32, i32, i32
  }
}

</mosaic_0001>

<llo_original>
// kernel: afford3d_forward.1
$region0: #{afford3d_forward.1}
  #allocation0 [shape = 'u32[]', space=smem, size = 0x4, offset = 0x4, fixed_abs, tag = 'smem constant byte address 0x4 - core index']
  #allocation1 [shape = 'u32[144,128]{1,0:T(1,128)}', space=vmem, size = 0x12000, scoped, tag = 'internal scratch']
  #allocation2 [shape = 's32[1]{0}', space=sflag, size = 0x4, scoped, tag = 'scoped memory for afford3d_forward.1']
  #allocation3 [shape = 'u8[512]{0}', space=smem, size = 0x200, scoped, tag = 'prefetched SMEM operand 0']
  %s0 = inlined_call_operand.vmem [shape: s32[3], index: 0, kind: input, shape index: {}]
  %s1 = inlined_call_operand.vmem [shape: f32[3], index: 1, kind: input, shape index: {}]
  %s2 = inlined_call_operand.vmem [shape: f32[3], index: 2, kind: input, shape index: {}]
  %s3 = inlined_call_operand.vmem [shape: bf16[2,136,384], index: 3, kind: input, shape index: {}]
  %s4 = inlined_call_operand.vmem [shape: bf16[3,144,136], index: 4, kind: input, shape index: {}]
  %s5 = inlined_call_operand.vmem [shape: f32[2,5,384], index: 5, kind: output, shape index: {0}]
  %s6 = inlined_call_operand.vmem [shape: f32[2,5,384], index: 6, kind: output, shape index: {1}]
  %7 = xla_tuple %s5, %s6
  %s8 = sld [smem:[#allocation0]]
  $region106: #{afford3d_forward.1} parent=0
    _
  %s10 = ssub.s32 1, %s8
  %s11 = scalar_select 0, %s10, %s8
  %s12 = sshll.u32 %s0, 4
  %s13 = int_to_ptr.vmem [resolvable:$true] %s12
  %15 = dma.vmem_to_smem %s13, 16, [#allocation3], [#allocation2]
  %16 = dma.done [#allocation2], 16
  %17 = sfence
  $region1: #{afford3d_forward.1} parent=0
    #allocation4 [shape = 'u8[512]{0}', space=smem, size = 0x200, scoped, tag = 'input window, operand 1, single buffered']
    #allocation5 [shape = 's32[2]{0}', space=sflag, size = 0x8, scoped, tag = 'scoped memory for afford3d_forward.1']
    #allocation6 [shape = 'u8[512]{0}', space=smem, size = 0x200, scoped, tag = 'input window, operand 2, single buffered']
    #allocation7 [shape = 's32[1]{0}', space=sflag, size = 0x4, scoped, tag = 'scoped memory for afford3d_forward.1']
    #allocation8 [shape = 'u8[69632]{0}', space=vmem, size = 0x11000, scoped, tag = 'input window, operand 3']
    %18 = vsyncpa [#allocation5], 0
    %19 = vsyncpa [#allocation7], 0
    loop: start=0, step=1, limit=8
    $region2: #{afford3d_forward.1} parent=1 // loop_pre_header
      _
    $region3: #{afford3d_forward.1} parent=1 // loop_header
      %s21 = sphi 0, %s25
      %p22 = scmp.ge.s32.totalorder %s21, 8
      %s28 = sphi 0, %s40
      %s29 = sphi 0, %s36
      %s30 = sphi 0, %s28
      %s31 = sphi 0, %s29
      %s32 = sphi 0, %s30
      %s33 = sphi 0, %s31
      %s41 = sphi 0, %s41
      %s43 = sphi 0, %s41
      %s44 = sphi 0, %s43
      %s58 = sphi 0, %s44
      %s62 = sphi 0, %s62
      %s64 = sphi 0, %s62
      %s65 = sphi 0, %s64
      %s79 = sphi 0, %s65
      %s87 = sphi 0, %s89
      %s90 = sphi 0, %s87
      %s91 = sphi 0, %s90
      %s107 = sphi 0, %s91
      %s115 = sphi 0, %s117
      %s118 = sphi 0, %s115
      %s119 = sphi 0, %s118
      %s135 = sphi 0, %s119
      %s143 = sphi 0, %s145
      %s146 = sphi 0, %s143
      %s147 = sphi 0, %s146
      %s163 = sphi 0, %s147
      %s171 = sphi 0, %s173
      %s174 = sphi 0, %s171
      %s175 = sphi 0, %s174
      %s191 = sphi 0, %s175
    $region4: #{afford3d_forward.1} parent=1 // loop_header_branch
      %24 = sbr.rel (%p22) target = $region8
    $region5: #{afford3d_forward.1} parent=1 // loop_body
      %s26 = ssub.s32 %s21, 1
      %s27 = ssub.s32 %s21, 2
      %s34 = sadd.s32 1, %s29
      %p35 = scmp.ge.s32.totalorder %s34, 3
      %s36 = scalar_select %p35, 0, %s34
      %s37 = sadd.s32 1, %s28
      %s38 = scalar_select %p35, %s37, %s28
      %p39 = scmp.ge.s32.totalorder %s38, 2
      %s40 = scalar_select %p39, 0, %s38
      %s42 = sadd.s32 %s41, 1
      %p45 = scmp.eq.s32.totalorder %s21, 5
      %p46 = scmp.ne.s32.totalorder %s41, %s43
      %p47 = scmp.eq.s32.totalorder %s21, 0
      %p48 = por %p46, %p47
      %p49 = scmp.ne.s32.totalorder %s41, %s43
      %p50 = scmp.eq.s32.totalorder %s26, 5
      %p51 = por %p49, %p50
      %p52 = scmp.ne.s32.totalorder %s43, %s44
      %p53 = scmp.eq.s32.totalorder %s26, 0
      %p54 = por %p52, %p53
      %p55 = scmp.ne.s32.totalorder %s43, %s44
      %p56 = scmp.eq.s32.totalorder %s27, 5
      %p57 = por %p55, %p56
      %p59 = scmp.ne.s32.totalorder %s44, %s58
      %p60 = scmp.eq.s32.totalorder %s27, 0
      %p61 = por %p59, %p60
      %s63 = sadd.s32 %s62, 1
      %p66 = scmp.eq.s32.totalorder %s21, 5
      %p67 = scmp.ne.s32.totalorder %s62, %s64
      %p68 = scmp.eq.s32.totalorder %s21, 0
      %p69 = por %p67, %p68
      %p70 = scmp.ne.s32.totalorder %s62, %s64
      %p71 = scmp.eq.s32.totalorder %s26, 5
      %p72 = por %p70, %p71
      %p73 = scmp.ne.s32.totalorder %s64, %s65
      %p74 = scmp.eq.s32.totalorder %s26, 0
      %p75 = por %p73, %p74
      %p76 = scmp.ne.s32.totalorder %s64, %s65
      %p77 = scmp.eq.s32.totalorder %s27, 5
      %p78 = por %p76, %p77
      %p80 = scmp.ne.s32.totalorder %s65, %s79
      %p81 = scmp.eq.s32.totalorder %s27, 0
      %p82 = por %p80, %p81
      %s83 = ssub.s32 %s28, %s40
      %s84 = ssub.s32 %s29, %s36
      %s85 = sor.u32 %s83, %s84
      %p86 = scmp.eq.s32.totalorder %s85, 0
      %s88 = sadd.s32 %s87, 1
      %s89 = scalar_select %p86, %s87, %s88
      %p92 = pneg %p86
      %p93 = scmp.eq.s32.totalorder %s21, 5
      %p94 = por %p92, %p93
      %p95 = scmp.ne.s32.totalorder %s87, %s90
      %p96 = scmp.eq.s32.totalorder %s21, 0
      %p97 = por %p95, %p96
      %p98 = scmp.ne.s32.totalorder %s87, %s90
      %p99 = scmp.eq.s32.totalorder %s26, 5
      %p100 = por %p98, %p99
      %p101 = scmp.ne.s32.totalorder %s90, %s91
      %p102 = scmp.eq.s32.totalorder %s26, 0
      %p103 = por %p101, %p102
      %p104 = scmp.ne.s32.totalorder %s90, %s91
      %p105 = scmp.eq.s32.totalorder %s27, 5
      %p106 = por %p104, %p105
      %p108 = scmp.ne.s32.totalorder %s91, %s107
      %p109 = scmp.eq.s32.totalorder %s27, 0
      %p110 = por %p108, %p109
      %s111 = sld [smem:[#allocation3 + %s29]]
      %s112 = sld [smem:[#allocation3 + %s36]]
      %s113 = ssub.s32 %s111, %s112
      %p114 = scmp.eq.s32.totalorder %s113, 0
      %s116 = sadd.s32 %s115, 1
      %s117 = scalar_select %p114, %s115, %s116
      %p120 = pneg %p114
      %p121 = scmp.eq.s32.totalorder %s21, 5
      %p122 = por %p120, %p121
      %p123 = scmp.ne.s32.totalorder %s115, %s118
      %p124 = scmp.eq.s32.totalorder %s21, 0
      %p125 = por %p123, %p124
      %p126 = scmp.ne.s32.totalorder %s115, %s118
      %p127 = scmp.eq.s32.totalorder %s26, 5
      %p128 = por %p126, %p127
      %p129 = scmp.ne.s32.totalorder %s118, %s119
      %p130 = scmp.eq.s32.totalorder %s26, 0
      %p131 = por %p129, %p130
      %p132 = scmp.ne.s32.totalorder %s118, %s119
      %p133 = scmp.eq.s32.totalorder %s27, 5
      %p134 = por %p132, %p133
      %p136 = scmp.ne.s32.totalorder %s119, %s135
      %p137 = scmp.eq.s32.totalorder %s27, 0
      %p138 = por %p136, %p137
      %s139 = ssub.s32 %s28, %s40
      %s140 = ssub.s32 %s29, %s36
      %s141 = sor.u32 %s139, %s140
      %p142 = scmp.eq.s32.totalorder %s141, 0
      %s144 = sadd.s32 %s143, 1
      %s145 = scalar_select %p142, %s143, %s144
      %p148 = pneg %p142
      %p149 = scmp.eq.s32.totalorder %s21, 5
      %p150 = por %p148, %p149
      %p151 = scmp.ne.s32.totalorder %s143, %s146
      %p152 = scmp.eq.s32.totalorder %s21, 0
      %p153 = por %p151, %p152
      %p154 = scmp.ne.s32.totalorder %s143, %s146
      %p155 = scmp.eq.s32.totalorder %s26, 5
      %p156 = por %p154, %p155
      %p157 = scmp.ne.s32.totalorder %s146, %s147
      %p158 = scmp.eq.s32.totalorder %s26, 0
      %p159 = por %p157, %p158
      %p160 = scmp.ne.s32.totalorder %s146, %s147
      %p161 = scmp.eq.s32.totalorder %s27, 5
      %p162 = por %p160, %p161
      %p164 = scmp.ne.s32.totalorder %s147, %s163
      %p165 = scmp.eq.s32.totalorder %s27, 0
      %p166 = por %p164, %p165
      %s167 = ssub.s32 %s28, %s40
      %s168 = ssub.s32 %s29, %s36
      %s169 = sor.u32 %s167, %s168
      %p170 = scmp.eq.s32.totalorder %s169, 0
      %s172 = sadd.s32 %s171, 1
      %s173 = scalar_select %p170, %s171, %s172
      %p176 = pneg %p170
      %p177 = scmp.eq.s32.totalorder %s21, 5
      %p178 = por %p176, %p177
      %p179 = scmp.ne.s32.totalorder %s171, %s174
      %p180 = scmp.eq.s32.totalorder %s21, 0
      %p181 = por %p179, %p180
      %p182 = scmp.ne.s32.totalorder %s171, %s174
      %p183 = scmp.eq.s32.totalorder %s26, 5
      %p184 = por %p182, %p183
      %p185 = scmp.ne.s32.totalorder %s174, %s175
      %p186 = scmp.eq.s32.totalorder %s26, 0
      %p187 = por %p185, %p186
      %p188 = scmp.ne.s32.totalorder %s174, %s175
      %p189 = scmp.eq.s32.totalorder %s27, 5
      %p190 = por %p188, %p189
      %p192 = scmp.ne.s32.totalorder %s175, %s191
      %p193 = scmp.eq.s32.totalorder %s27, 0
      %p194 = por %p192, %p193
      %p195 = scmp.le.s32.totalorder 1, %s21
      %p196 = scmp.lt.s32.totalorder %s21, 7
      %p197 = pnand %p195, %p196
      %p198 = pneg %p197
      // Predicated region
      $region9: #{afford3d_forward.1} parent=5 // pred_check
        _
      $region10: #{afford3d_forward.1} parent=5 // pred_check_branch
        %200 = sbr.rel (%p197) target = $region12
      $region11: #{afford3d_forward.1} parent=5 // pred_region
        %s201 = ssub.s32 %s21, 1
        // Predicated region
        $region13: #{afford3d_forward.1} parent=11 // pred_check
          %p202 = pneg %p54
        $region14: #{afford3d_forward.1} parent=11 // pred_check_branch
          %204 = sbr.rel (%p202) target = $region16
        $region15: #{afford3d_forward.1} parent=11 // pred_region
          %s206 = ssub.s32 16, 16
          %207 = vsyncadd [#allocation5], %s206
          %s209 = sshll.u32 %s1, 4
          %s210 = int_to_ptr.vmem [resolvable:$true] %s209
          %212 = dma.vmem_to_smem %s210, 16, [#allocation4], [#allocation5]
        $region16: #{afford3d_forward.1} parent=11 // pred_fallthru
          _
        // Predicated region
        $region17: #{afford3d_forward.1} parent=11 // pred_check
          %p213 = pneg %p75
        $region18: #{afford3d_forward.1} parent=11 // pred_check_branch
          %215 = sbr.rel (%p213) target = $region20
        $region19: #{afford3d_forward.1} parent=11 // pred_region
          %s217 = ssub.s32 16, 16
          %218 = vsyncadd [#allocation7], %s217
          %s220 = sshll.u32 %s2, 4
          %s221 = int_to_ptr.vmem [resolvable:$true] %s220
          %223 = dma.vmem_to_smem %s221, 16, [#allocation6], [#allocation7]
        $region20: #{afford3d_forward.1} parent=11 // pred_fallthru
          _
      $region12: #{afford3d_forward.1} parent=5 // pred_fallthru
        _
      %p224 = scmp.lt.s32.totalorder %s21, 6
      // Predicated region
      $region21: #{afford3d_forward.1} parent=5 // pred_check
        %p225 = pneg %p224
      $region22: #{afford3d_forward.1} parent=5 // pred_check_branch
        %227 = sbr.rel (%p225) target = $region24
      $region23: #{afford3d_forward.1} parent=5 // pred_region
        // Predicated region
        $region25: #{afford3d_forward.1} parent=23 // pred_check
          %p228 = pneg %p97
        $region26: #{afford3d_forward.1} parent=23 // pred_check_branch
          %230 = sbr.rel (%p228) target = $region28
        $region27: #{afford3d_forward.1} parent=23 // pred_region
          %s231 = sand.u32 %s87, 1
          %s232 = sand.u32 %s87, 1
          %s233 = smul.addr %s232, 68
          %s234 = scalar_lea.vmem [#allocation8], %s233
          %s235 = smul.addr %s28, 51
          %s236 = sadd.s32 %s29, %s235
          %s237 = smul.addr %s236, 4
          %s238 = scalar_lea.vmem %s3, %s237
          // Predicated region
          $region29: #{afford3d_forward.1} parent=27 // pred_check
            _
          $region30: #{afford3d_forward.1} parent=27 // pred_check_branch
            %240 = sbr.rel (0) target = $region32
          $region31: #{afford3d_forward.1} parent=27 // pred_region
            // Predicated region
            $region33: #{afford3d_forward.1} parent=31 // pred_check
              _
            $region34: #{afford3d_forward.1} parent=31 // pred_check_branch
              %242 = sbr.rel target = $region36
            $region35: #{afford3d_forward.1} parent=31 // pred_region
              // Predicated region
              $region48: #{afford3d_forward.1} parent=35 // pred_check
                _
              $region49: #{afford3d_forward.1} parent=35 // pred_check_branch
                %290 = sbr.rel (0) target = $region51
              $region50: #{afford3d_forward.1} parent=35 // pred_region
                loop: start=0, step=1, limit=1
                $region52: #{afford3d_forward.1} parent=50 // loop_pre_header
                  _
                $region53: #{afford3d_forward.1} parent=50 // loop_header
                  %s292 = sphi 0, %s296
                  %p293 = scmp.ge.s32.totalorder %s292, 1
                  %s297 = sphi %s238, %s238
                  %s298 = sphi %s234, %s234
                $region54: #{afford3d_forward.1} parent=50 // loop_header_branch
                  %295 = sbr.rel (%p293) target = $region58
                $region55: #{afford3d_forward.1} parent=50 // loop_body
                  _
                $region56: #{afford3d_forward.1} parent=50 // loop_footer
                  %s296 = sadd.s32 1, %s292
                $region57: #{afford3d_forward.1} parent=50 // loop_footer_branch
                  %291 = sbr.rel target = $region53
                $region58: #{afford3d_forward.1} parent=50 // loop_exit
                  _
                %s300 = ssub.s32 16, 1
                loop: start=0, step=1, limit=1
                $region59: #{afford3d_forward.1} parent=50 // loop_pre_header
                  _
                $region60: #{afford3d_forward.1} parent=50 // loop_header
                  %s302 = sphi 0, %s306
                  %p303 = scmp.ge.s32.totalorder %s302, 1
                  %s307 = sphi %s238, %s238
                  %s308 = sphi %s234, %s234
                $region61: #{afford3d_forward.1} parent=50 // loop_header_branch
                  %305 = sbr.rel (%p303) target = $region65
                $region62: #{afford3d_forward.1} parent=50 // loop_body
                  %v309 = vld [vmem:[%s307] sm:%s300]
                  %310 = vst [vmem:[%s308] sm:%s300] %v309
                  %v311 = vld [vmem:[%s307 + $0xc] sm:%s300]
                  %312 = vst [vmem:[%s308 + $0x4] sm:%s300] %v311
                  %v313 = vld [vmem:[%s307 + $0x18] sm:%s300]
                  %314 = vst [vmem:[%s308 + $0x8] sm:%s300] %v313
                  %v315 = vld [vmem:[%s307 + $0x24] sm:%s300]
                  %316 = vst [vmem:[%s308 + $0xc] sm:%s300] %v315
                  %v317 = vld [vmem:[%s307 + $0x30] sm:%s300]
                  %318 = vst [vmem:[%s308 + $0x10] sm:%s300] %v317
                  %v319 = vld [vmem:[%s307 + $0x3c] sm:%s300]
                  %320 = vst [vmem:[%s308 + $0x14] sm:%s300] %v319
                  %v321 = vld [vmem:[%s307 + $0x48] sm:%s300]
                  %322 = vst [vmem:[%s308 + $0x18] sm:%s300] %v321
                  %v323 = vld [vmem:[%s307 + $0x54] sm:%s300]
                  %324 = vst [vmem:[%s308 + $0x1c] sm:%s300] %v323
                  %v325 = vld [vmem:[%s307 + $0x60] sm:%s300]
                  %326 = vst [vmem:[%s308 + $0x20] sm:%s300] %v325
                  %v327 = vld [vmem:[%s307 + $0x6c] sm:%s300]
                  %328 = vst [vmem:[%s308 + $0x24] sm:%s300] %v327
                  %v329 = vld [vmem:[%s307 + $0x78] sm:%s300]
                  %330 = vst [vmem:[%s308 + $0x28] sm:%s300] %v329
                  %v331 = vld [vmem:[%s307 + $0x84] sm:%s300]
                  %332 = vst [vmem:[%s308 + $0x2c] sm:%s300] %v331
                  %v333 = vld [vmem:[%s307 + $0x90] sm:%s300]
                  %334 = vst [vmem:[%s308 + $0x30] sm:%s300] %v333
                  %v335 = vld [vmem:[%s307 + $0x9c] sm:%s300]
                  %336 = vst [vmem:[%s308 + $0x34] sm:%s300] %v335
                  %v337 = vld [vmem:[%s307 + $0xa8] sm:%s300]
                  %338 = vst [vmem:[%s308 + $0x38] sm:%s300] %v337
                  %v339 = vld [vmem:[%s307 + $0xb4] sm:%s300]
                  %340 = vst [vmem:[%s308 + $0x3c] sm:%s300] %v339
                  %v341 = vld [vmem:[%s307 + $0xc0] sm:%s300]
                  %342 = vst [vmem:[%s308 + $0x40] sm:%s300] %v341
                $region63: #{afford3d_forward.1} parent=50 // loop_footer
                  %s306 = sadd.s32 1, %s302
                $region64: #{afford3d_forward.1} parent=50 // loop_footer_branch
                  %301 = sbr.rel target = $region60
                $region65: #{afford3d_forward.1} parent=50 // loop_exit
                  _
              $region51: #{afford3d_forward.1} parent=35 // pred_fallthru
                _
            $region36: #{afford3d_forward.1} parent=31 // pred_fallthru
              _
            // Predicated region
            $region37: #{afford3d_forward.1} parent=31 // pred_check
              _
            $region38: #{afford3d_forward.1} parent=31 // pred_check_branch
              %244 = sbr.rel (0) target = $region40
            $region39: #{afford3d_forward.1} parent=31 // pred_region
              %s246 = ssub.s32 16, 1
              loop: start=0, step=1, limit=1
              $region41: #{afford3d_forward.1} parent=39 // loop_pre_header
                _
              $region42: #{afford3d_forward.1} parent=39 // loop_header
                %s248 = sphi 0, %s252
                %p249 = scmp.ge.s32.totalorder %s248, 1
                %s253 = sphi %s238, %s238
                %s254 = sphi %s234, %s234
              $region43: #{afford3d_forward.1} parent=39 // loop_header_branch
                %251 = sbr.rel (%p249) target = $region47
              $region44: #{afford3d_forward.1} parent=39 // loop_body
                %v255 = vld [vmem:[%s253] sm:%s246]
                %256 = vst [vmem:[%s254] sm:%s246] %v255
                %v257 = vld [vmem:[%s253 + $0xc] sm:%s246]
                %258 = vst [vmem:[%s254 + $0x4] sm:%s246] %v257
                %v259 = vld [vmem:[%s253 + $0x18] sm:%s246]
                %260 = vst [vmem:[%s254 + $0x8] sm:%s246] %v259
                %v261 = vld [vmem:[%s253 + $0x24] sm:%s246]
                %262 = vst [vmem:[%s254 + $0xc] sm:%s246] %v261
                %v263 = vld [vmem:[%s253 + $0x30] sm:%s246]
                %264 = vst [vmem:[%s254 + $0x10] sm:%s246] %v263
                %v265 = vld [vmem:[%s253 + $0x3c] sm:%s246]
                %266 = vst [vmem:[%s254 + $0x14] sm:%s246] %v265
                %v267 = vld [vmem:[%s253 + $0x48] sm:%s246]
                %268 = vst [vmem:[%s254 + $0x18] sm:%s246] %v267
                %v269 = vld [vmem:[%s253 + $0x54] sm:%s246]
                %270 = vst [vmem:[%s254 + $0x1c] sm:%s246] %v269
                %v271 = vld [vmem:[%s253 + $0x60] sm:%s246]
                %272 = vst [vmem:[%s254 + $0x20] sm:%s246] %v271
                %v273 = vld [vmem:[%s253 + $0x6c] sm:%s246]
                %274 = vst [vmem:[%s254 + $0x24] sm:%s246] %v273
                %v275 = vld [vmem:[%s253 + $0x78] sm:%s246]
                %276 = vst [vmem:[%s254 + $0x28] sm:%s246] %v275
                %v277 = vld [vmem:[%s253 + $0x84] sm:%s246]
                %278 = vst [vmem:[%s254 + $0x2c] sm:%s246] %v277
                %v279 = vld [vmem:[%s253 + $0x90] sm:%s246]
                %280 = vst [vmem:[%s254 + $0x30] sm:%s246] %v279
                %v281 = vld [vmem:[%s253 + $0x9c] sm:%s246]
                %282 = vst [vmem:[%s254 + $0x34] sm:%s246] %v281
                %v283 = vld [vmem:[%s253 + $0xa8] sm:%s246]
                %284 = vst [vmem:[%s254 + $0x38] sm:%s246] %v283
                %v285 = vld [vmem:[%s253 + $0xb4] sm:%s246]
                %286 = vst [vmem:[%s254 + $0x3c] sm:%s246] %v285
                %v287 = vld [vmem:[%s253 + $0xc0] sm:%s246]
                %288 = vst [vmem:[%s254 + $0x40] sm:%s246] %v287
              $region45: #{afford3d_forward.1} parent=39 // loop_footer
                %s252 = sadd.s32 1, %s248
              $region46: #{afford3d_forward.1} parent=39 // loop_footer_branch
                %247 = sbr.rel target = $region42
              $region47: #{afford3d_forward.1} parent=39 // loop_exit
                _
            $region40: #{afford3d_forward.1} parent=31 // pred_fallthru
              _
          $region32: #{afford3d_forward.1} parent=27 // pred_fallthru
            _
          %343 = vnop
        $region28: #{afford3d_forward.1} parent=23 // pred_fallthru
          _
        // Predicated region
        $region66: #{afford3d_forward.1} parent=23 // pred_check
          %p344 = pneg %p125
        $region67: #{afford3d_forward.1} parent=23 // pred_check_branch
          %346 = sbr.rel (%p344) target = $region69
        $region68: #{afford3d_forward.1} parent=23 // pred_region
          %s347 = sld [smem:[#allocation3 + %s29]]
          %p348 = scmp.lt.s32.totalorder %s347, 2
          %s349 = scalar_select %p348, %s347, 2
          %s350 = smul.addr %s349, 36
          %s351 = smul.addr %s350, 4
          %s352 = scalar_lea.vmem %s4, %s351
          %s353 = sld [smem:[#allocation3 + %s29]]
        $region69: #{afford3d_forward.1} parent=23 // pred_fallthru
          _
      $region24: #{afford3d_forward.1} parent=5 // pred_fallthru
        _
      %p354 = scmp.le.s32.totalorder 1, %s21
      %p355 = scmp.lt.s32.totalorder %s21, 7
      %p356 = pnand %p354, %p355
      %p357 = pneg %p356
      // Predicated region
      $region70: #{afford3d_forward.1} parent=5 // pred_check
        _
      $region71: #{afford3d_forward.1} parent=5 // pred_check_branch
        %359 = sbr.rel (%p356) target = $region73
      $region72: #{afford3d_forward.1} parent=5 // pred_region
        %s360 = ssub.s32 %s21, 1
        // Predicated region
        $region74: #{afford3d_forward.1} parent=72 // pred_check
          %p361 = pneg %p54
        $region75: #{afford3d_forward.1} parent=72 // pred_check_branch
          %363 = sbr.rel (%p361) target = $region77
        $region76: #{afford3d_forward.1} parent=72 // pred_region
          %364 = dma.done [#allocation5], 16
        $region77: #{afford3d_forward.1} parent=72 // pred_fallthru
          _
        // Predicated region
        $region78: #{afford3d_forward.1} parent=72 // pred_check
          %p365 = pneg %p75
        $region79: #{afford3d_forward.1} parent=72 // pred_check_branch
          %367 = sbr.rel (%p365) target = $region81
        $region80: #{afford3d_forward.1} parent=72 // pred_region
          %368 = dma.done [#allocation7], 16
        $region81: #{afford3d_forward.1} parent=72 // pred_fallthru
          _
        %s369 = sand.u32 %s90, 1
        %s370 = sand.u32 %s90, 1
        %s371 = smul.addr %s370, 68
        %s372 = scalar_lea.vmem [#allocation8], %s371
        // Predicated region
        $region82: #{afford3d_forward.1} parent=72 // pred_check
          %p373 = pneg %p103
        $region83: #{afford3d_forward.1} parent=72 // pred_check_branch
          %375 = sbr.rel (%p373) target = $region85
        $region84: #{afford3d_forward.1} parent=72 // pred_region
          _
        $region85: #{afford3d_forward.1} parent=72 // pred_fallthru
          _
        %376 = sfence
        %p377 = pneg %p54
        %p378 = pneg %p51
        %p379 = pneg %p75
        %p380 = pneg %p72
        %s381 = sand.u32 %s90, 1
        %s382 = sand.u32 %s90, 1
        %s383 = smul.addr %s382, 68
        %s384 = scalar_lea.vmem [#allocation8], %s383
        %p385 = pneg %p103
        %p386 = pneg %p100
        %s387 = sld [smem:[#allocation3 + %s31]]
        %p388 = scmp.lt.s32.totalorder %s387, 2
        %s389 = scalar_select %p388, %s387, 2
        %s390 = smul.addr %s389, 36
        %s391 = smul.addr %s390, 4
        %s392 = scalar_lea.vmem %s4, %s391
        %p393 = pneg %p131
        %p394 = pneg %p128
        %p395 = pneg %p159
        %p396 = pneg %p156
        %p397 = scmp.lt.s32.totalorder %s30, 1
        %s398 = scalar_select %p397, %s30, 1
        %p399 = scmp.lt.s32.totalorder %s31, 2
        %s400 = scalar_select %p399, %s31, 2
        %s401 = smul.addr %s398, 3
        %s402 = sadd.s32 %s400, %s401
        %s403 = smul.addr %s402, 8
        %s404 = scalar_lea.vmem %s5, %s403
        %p405 = pneg %p187
        %p406 = pneg %p184
        %p407 = scmp.lt.s32.totalorder %s30, 1
        %s408 = scalar_select %p407, %s30, 1
        %p409 = scmp.lt.s32.totalorder %s31, 2
        %s410 = scalar_select %p409, %s31, 2
        %s411 = smul.addr %s408, 3
        %s412 = sadd.s32 %s410, %s411
        %s413 = smul.addr %s412, 8
        %s414 = scalar_lea.vmem %s6, %s413
        %s415 = sld [smem:[#allocation3 + %s31]]
        %p416 = scmp.lt.s32.totalorder %s415, 2
        %s417 = scalar_select %p416, %s415, 2
        %s418 = smul.addr %s417, 36
        %s419 = smul.addr %s418, 4
        %s420 = scalar_lea.vmem %s4, %s419
        %s421 = sld [smem:[#allocation3 + %s31]]
        %p422 = scmp.lt.s32.totalorder %s30, 1
        %s423 = scalar_select %p422, %s30, 1
        %p424 = scmp.lt.s32.totalorder %s31, 2
        %s425 = scalar_select %p424, %s31, 2
        %s426 = smul.addr %s423, 3
        %s427 = sadd.s32 %s425, %s426
        %s428 = smul.addr %s427, 8
        %s429 = scalar_lea.vmem %s5, %s428
        %p430 = scmp.lt.s32.totalorder %s30, 1
        %s431 = scalar_select %p430, %s30, 1
        %p432 = scmp.lt.s32.totalorder %s31, 2
        %s433 = scalar_select %p432, %s31, 2
        %s434 = smul.addr %s431, 3
        %s435 = sadd.s32 %s433, %s434
        %s436 = smul.addr %s435, 8
        %s437 = scalar_lea.vmem %s6, %s436
        %s439 = sld [smem:[#allocation3 + %s31]]
        %v440 = vld [vmem:[%s372] sm:$0xf]
        %v441 = vld [vmem:[%s372 + $0x4] sm:$0xf]
        %v442 = vld [vmem:[%s372 + $0x8] sm:$0xf]
        %v443 = vld [vmem:[%s372 + $0xc] sm:$0xf]
        %v444 = vld [vmem:[%s372 + $0x10] sm:$0xf]
        %v445 = vld [vmem:[%s372 + $0x14] sm:$0xf]
        %v446 = vld [vmem:[%s372 + $0x18] sm:$0xf]
        %v447 = vld [vmem:[%s372 + $0x1c] sm:$0xf]
        %v448 = vld [vmem:[%s372 + $0x20] sm:$0xf]
        %v449 = vld [vmem:[%s372 + $0x24] sm:$0xf]
        %v450 = vld [vmem:[%s372 + $0x28] sm:$0xf]
        %v451 = vld [vmem:[%s372 + $0x2c] sm:$0xf]
        %v452 = vld [vmem:[%s372 + $0x30] sm:$0xf]
        %v453 = vld [vmem:[%s372 + $0x34] sm:$0xf]
        %v454 = vld [vmem:[%s372 + $0x38] sm:$0xf]
        %v455 = vld [vmem:[%s372 + $0x3c] sm:$0xf]
        %v456 = vld [vmem:[%s372 + $0x40] sm:$0xf]
        %v457 = vld [vmem:[%s420] sm:$0xff]
        %v458 = vld [vmem:[%s420 + $0x8] sm:$0xff]
        %v459 = vld [vmem:[%s420 + $0x10] sm:$0xff]
        %v460 = vld [vmem:[%s420 + $0x18] sm:$0xff]
        %v461 = vld [vmem:[%s420 + $0x20] sm:$0xff]
        %v462 = vld [vmem:[%s420 + $0x28] sm:$0xff]
        %v463 = vld [vmem:[%s420 + $0x30] sm:$0xff]
        %v464 = vld [vmem:[%s420 + $0x38] sm:$0xff]
        %v465 = vld [vmem:[%s420 + $0x40] sm:$0xff]
        %v466 = vld [vmem:[%s420 + $0x48] sm:$0xff]
        %v467 = vld [vmem:[%s420 + $0x50] sm:$0xff]
        %v468 = vld [vmem:[%s420 + $0x58] sm:$0xff]
        %v469 = vld [vmem:[%s420 + $0x60] sm:$0xff]
        %v470 = vld [vmem:[%s420 + $0x68] sm:$0xff]
        %v471 = vld [vmem:[%s420 + $0x70] sm:$0xff]
        %v472 = vld [vmem:[%s420 + $0x78] sm:$0xff]
        %v473 = vld [vmem:[%s420 + $0x80] sm:$0xff]
        %v474 = vld [vmem:[%s420 + $0x88] sm:$0xff]
        %v493 = vunpack.c.l.b16 %v457
        %v494 = vunpack.c.h.b16 %v457
        %v495 = vunpack.c.l.b16 %v458
        %v496 = vunpack.c.h.b16 %v458
        %v497 = vunpack.c.l.b16 %v459
        %v498 = vunpack.c.h.b16 %v459
        %v499 = vunpack.c.l.b16 %v460
        %v500 = vunpack.c.h.b16 %v460
        %v501 = vunpack.c.l.b16 %v461
        %v502 = vunpack.c.h.b16 %v461
        %v503 = vunpack.c.l.b16 %v462
        %v504 = vunpack.c.h.b16 %v462
        %v505 = vunpack.c.l.b16 %v463
        %v506 = vunpack.c.h.b16 %v463
        %v507 = vunpack.c.l.b16 %v464
        %v508 = vunpack.c.h.b16 %v464
        %v509 = vunpack.c.l.b16 %v465
        %v510 = vunpack.c.h.b16 %v465
        %v511 = vunpack.c.l.b16 %v466
        %v512 = vunpack.c.h.b16 %v466
        %v513 = vunpack.c.l.b16 %v467
        %v514 = vunpack.c.h.b16 %v467
        %v515 = vunpack.c.l.b16 %v468
        %v516 = vunpack.c.h.b16 %v468
        %v517 = vunpack.c.l.b16 %v469
        %v518 = vunpack.c.h.b16 %v469
        %v519 = vunpack.c.l.b16 %v470
        %v520 = vunpack.c.h.b16 %v470
        %v521 = vunpack.c.l.b16 %v471
        %v522 = vunpack.c.h.b16 %v471
        %v523 = vunpack.c.l.b16 %v472
        %v524 = vunpack.c.h.b16 %v472
        %v525 = vunpack.c.l.b16 %v473
        %v526 = vunpack.c.h.b16 %v473
        %v527 = vunpack.c.l.b16 %v474
        %v528 = vunpack.c.h.b16 %v474
        %v529 = vpack.c.b16 %v495, %v493
        %v530 = vpack.c.b16 %v496, %v494
        %v531 = vpack.c.b16 %v499, %v497
        %v532 = vpack.c.b16 %v500, %v498
        %v533 = vpack.c.b16 %v503, %v501
        %v534 = vpack.c.b16 %v504, %v502
        %v535 = vpack.c.b16 %v507, %v505
        %v536 = vpack.c.b16 %v508, %v506
        %v537 = vpack.c.b16 %v511, %v509
        %v538 = vpack.c.b16 %v512, %v510
        %v539 = vpack.c.b16 %v515, %v513
        %v540 = vpack.c.b16 %v516, %v514
        %v541 = vpack.c.b16 %v519, %v517
        %v542 = vpack.c.b16 %v520, %v518
        %v543 = vpack.c.b16 %v523, %v521
        %v544 = vpack.c.b16 %v524, %v522
        %v545 = vpack.c.b16 %v527, %v525
        %v546 = vpack.c.b16 %v528, %v526
        %v573 = vunpack.c.l.b16 %v440
        %v574 = vunpack.c.l.b16 %v441
        %v575 = vunpack.c.l.b16 %v442
        %v576 = vunpack.c.l.b16 %v443
        %v577 = vunpack.c.l.b16 %v444
        %v578 = vunpack.c.l.b16 %v445
        %v579 = vunpack.c.l.b16 %v446
        %v580 = vunpack.c.l.b16 %v447
        %v581 = vunpack.c.l.b16 %v448
        %v582 = vunpack.c.l.b16 %v449
        %v583 = vunpack.c.l.b16 %v450
        %v584 = vunpack.c.l.b16 %v451
        %v585 = vunpack.c.l.b16 %v452
        %v586 = vunpack.c.l.b16 %v453
        %v587 = vunpack.c.l.b16 %v454
        %v588 = vunpack.c.l.b16 %v455
        %v589 = vunpack.c.l.b16 %v456
        %v590 = vpack.c.b16 %v574, %v573
        %v591 = vpack.c.b16 %v576, %v575
        %v592 = vpack.c.b16 %v578, %v577
        %v593 = vpack.c.b16 %v580, %v579
        %v594 = vpack.c.b16 %v582, %v581
        %v595 = vpack.c.b16 %v584, %v583
        %v596 = vpack.c.b16 %v586, %v585
        %v597 = vpack.c.b16 %v588, %v587
        %v598 = vpack.c.b16 %v589, %v589
        %vm607 = vcmask 64512
        %v609 = vsel %vm607, %v530, 0
        %v612 = vsel %vm607, %v532, 0
        %v615 = vsel %vm607, %v534, 0
        %v618 = vsel %vm607, %v536, 0
        %v621 = vsel %vm607, %v538, 0
        %v624 = vsel %vm607, %v540, 0
        %v627 = vsel %vm607, %v542, 0
        %v630 = vsel %vm607, %v544, 0
        %v633 = vsel %vm607, %v546, 0
        %vm635 = vcmask 1043456
        %v637 = vsel %vm635, %v598, 0
        %639 = vmatprep.subr.bf16.mxu0 0
        %640 = vmatpush1.bf16.msra.mxu0 %v597
        %641 = vmatprep.subr.bf16.mxu0 0
        %642 = vmatpush1.bf16.msra.mxu0 %v596
        %643 = vmatprep.subr.bf16.mxu0 0
        %644 = vmatpush1.bf16.msra.mxu0 %v595
        %645 = vmatprep.subr.bf16.mxu0 0
        %646 = vmatpush1.bf16.msra.mxu0 %v594
        %647 = vmatprep.subr.bf16.mxu0 0
        %648 = vmatpush1.bf16.msra.mxu0 %v593
        %649 = vmatprep.subr.bf16.mxu0 0
        %650 = vmatpush1.bf16.msra.mxu0 %v592
        %651 = vmatprep.subr.bf16.mxu0 0
        %652 = vmatpush1.bf16.msra.mxu0 %v591
        %653 = vmatprep.subr.bf16.mxu0 0
        %654 = vmatpush1.bf16.msra.mxu0 %v590
        %655 = vmatprep.subr.bf16.mxu0 0
        %656 = vmatpush2.bf16.msra.mxu0 0
        %657 = vmatprep.subr.bf16.mxu0 0
        %658 = vmatpush2.bf16.msra.mxu0 0
        %659 = vmatprep.subr.bf16.mxu0 0
        %660 = vmatpush2.bf16.msra.mxu0 0
        %661 = vmatprep.subr.bf16.mxu0 0
        %662 = vmatpush2.bf16.msra.mxu0 0
        %663 = vmatprep.subr.bf16.mxu0 0
        %664 = vmatpush2.bf16.msra.mxu0 0
        %665 = vmatprep.subr.bf16.mxu0 0
        %666 = vmatpush2.bf16.msra.mxu0 0
        %667 = vmatprep.subr.bf16.mxu0 0
        %668 = vmatpush2.bf16.msra.mxu0 0
        %669 = vmatprep.subr.bf16.mxu0 0
        %670 = vmatpush2.bf16.msra.mxu0 %v637
        %671 = vmatprep.mubr.bf16.mxu0 %v609
        %672 = vmatmul.mubr.bf16.gmra.mxu0 %v529
        %v673 = vpop.f32.mrf.mxu0
        %v674 = vadd.f32 0.0, %v673
        %v675 = vpop.f32.mrf.mxu0
        %v676 = vpop.f32.mrf.mxu0
        %v677 = vadd.f32 0.0, %v676
        %v678 = vpop.f32.mrf.mxu0
        %679 = vmatprep.mubr.bf16.mxu0 %v612
        %680 = vmatmul.mubr.bf16.gmra.mxu0 %v531
        %v681 = vpop.f32.mrf.mxu0
        %v682 = vadd.f32 0.0, %v681
        %v683 = vpop.f32.mrf.mxu0
        %v684 = vpop.f32.mrf.mxu0
        %v685 = vadd.f32 0.0, %v684
        %v686 = vpop.f32.mrf.mxu0
        %687 = vmatprep.mubr.bf16.mxu0 %v615
        %688 = vmatmul.mubr.bf16.gmra.mxu0 %v533
        %v689 = vpop.f32.mrf.mxu0
        %v690 = vadd.f32 0.0, %v689
        %v691 = vpop.f32.mrf.mxu0
        %v692 = vpop.f32.mrf.mxu0
        %v693 = vadd.f32 0.0, %v692
        %v694 = vpop.f32.mrf.mxu0
        %695 = vmatprep.mubr.bf16.mxu0 %v618
        %696 = vmatmul.mubr.bf16.gmra.mxu0 %v535
        %v697 = vpop.f32.mrf.mxu0
        %v698 = vadd.f32 0.0, %v697
        %v699 = vpop.f32.mrf.mxu0
        %v700 = vpop.f32.mrf.mxu0
        %v701 = vadd.f32 0.0, %v700
        %v702 = vpop.f32.mrf.mxu0
        %703 = vmatprep.mubr.bf16.mxu0 %v621
        %704 = vmatmul.mubr.bf16.gmra.mxu0 %v537
        %v705 = vpop.f32.mrf.mxu0
        %v706 = vadd.f32 0.0, %v705
        %v707 = vpop.f32.mrf.mxu0
        %v708 = vpop.f32.mrf.mxu0
        %v709 = vadd.f32 0.0, %v708
        %v710 = vpop.f32.mrf.mxu0
        %711 = vmatprep.mubr.bf16.mxu0 %v624
        %712 = vmatmul.mubr.bf16.gmra.mxu0 %v539
        %v713 = vpop.f32.mrf.mxu0
        %v714 = vadd.f32 0.0, %v713
        %v715 = vpop.f32.mrf.mxu0
        %v716 = vpop.f32.mrf.mxu0
        %v717 = vadd.f32 0.0, %v716
        %v718 = vpop.f32.mrf.mxu0
        %719 = vmatprep.mubr.bf16.mxu0 %v627
        %720 = vmatmul.mubr.bf16.gmra.mxu0 %v541
        %v721 = vpop.f32.mrf.mxu0
        %v722 = vadd.f32 0.0, %v721
        %v723 = vpop.f32.mrf.mxu0
        %v724 = vpop.f32.mrf.mxu0
        %v725 = vadd.f32 0.0, %v724
        %v726 = vpop.f32.mrf.mxu0
        %727 = vmatprep.mubr.bf16.mxu0 %v630
        %728 = vmatmul.mubr.bf16.gmra.mxu0 %v543
        %v729 = vpop.f32.mrf.mxu0
        %v730 = vadd.f32 0.0, %v729
        %v731 = vpop.f32.mrf.mxu0
        %v732 = vpop.f32.mrf.mxu0
        %v733 = vadd.f32 0.0, %v732
        %v734 = vpop.f32.mrf.mxu0
        %735 = vmatprep.mubr.bf16.mxu0 %v633
        %736 = vmatmul.mubr.bf16.gmra.mxu0 %v545
        %v737 = vpop.f32.mrf.mxu0
        %v738 = vadd.f32 0.0, %v737
        %v739 = vpop.f32.mrf.mxu0
        %v740 = vpop.f32.mrf.mxu0
        %v741 = vadd.f32 0.0, %v740
        %v742 = vpop.f32.mrf.mxu0
        %743 = vdwg.mxu0
        %v744 = vunpack.c.l.bf16 %v440
        %v745 = vunpack.c.l.bf16 %v441
        %v746 = vunpack.c.l.bf16 %v442
        %v747 = vunpack.c.l.bf16 %v443
        %v748 = vunpack.c.l.bf16 %v444
        %v749 = vunpack.c.l.bf16 %v445
        %v750 = vunpack.c.l.bf16 %v446
        %v751 = vunpack.c.l.bf16 %v447
        %v752 = vunpack.c.l.bf16 %v448
        %v753 = vunpack.c.l.bf16 %v449
        %v754 = vunpack.c.l.bf16 %v450
        %v755 = vunpack.c.l.bf16 %v451
        %v756 = vunpack.c.l.bf16 %v452
        %v757 = vunpack.c.l.bf16 %v453
        %v758 = vunpack.c.l.bf16 %v454
        %v759 = vunpack.c.l.bf16 %v455
        %v760 = vunpack.c.l.bf16 %v456
        %v761 = vmul.f32 %v744, %v674
        %v762 = vmul.f32 %v745, %v677
        %v763 = vmul.f32 %v746, %v682
        %v764 = vmul.f32 %v747, %v685
        %v765 = vmul.f32 %v748, %v690
        %v766 = vmul.f32 %v749, %v693
        %v767 = vmul.f32 %v750, %v698
        %v768 = vmul.f32 %v751, %v701
        %v769 = vmul.f32 %v752, %v706
        %v770 = vmul.f32 %v753, %v709
        %v771 = vmul.f32 %v754, %v714
        %v772 = vmul.f32 %v755, %v717
        %v773 = vmul.f32 %v756, %v722
        %v774 = vmul.f32 %v757, %v725
        %v775 = vmul.f32 %v758, %v730
        %v776 = vmul.f32 %v759, %v733
        %v777 = vmul.f32 %v760, %v738
        %v778 = vadd.f32 %v761, %v762
        %v779 = vadd.f32 %v778, %v763
        %v780 = vadd.f32 %v779, %v764
        %v781 = vadd.f32 %v780, %v765
        %v782 = vadd.f32 %v781, %v766
        %v783 = vadd.f32 %v782, %v767
        %v784 = vadd.f32 %v783, %v768
        %v785 = vadd.f32 %v784, %v769
        %v786 = vadd.f32 %v785, %v770
        %v787 = vadd.f32 %v786, %v771
        %v788 = vadd.f32 %v787, %v772
        %v789 = vadd.f32 %v788, %v773
        %v790 = vadd.f32 %v789, %v774
        %v791 = vadd.f32 %v790, %v775
        %v792 = vadd.f32 %v791, %v776
        %v793 = vadd.f32 %v792, %v777
        %v794 = vrot.slane %v793, 4
        %v795 = vadd.f32 %v793, %v794
        %v796 = vrot.slane %v795, 2
        %v797 = vadd.f32 %v795, %v796
        %v798 = vrot.slane %v797, 1
        %v799 = vadd.f32 %v797, %v798
        %v800 = vmax.f32 %v799, 0.0
        %v801 = vadd.f32 %v800, 1e-12
        %v802 = vrsqrt.pop %v801
        %v803 = vmul.f32 %v741, %v802
        %s804 = sld [smem:[#allocation4 + %s439]]
        %v805 = vstv %s804
        %v806 = vmul.f32 %v805, %v803
        %vm807 = vcmask 1044480
        %v808 = vsel %vm807, %v806, -inf
        %v809 = vrot.slane %v808, 4
        %v810 = vmax.f32 %v808, %v809
        %v811 = vrot.slane %v810, 2
        %v812 = vmax.f32 %v810, %v811
        %v813 = vrot.slane %v812, 1
        %v814 = vmax.f32 %v812, %v813
        %v815 = vsub.f32 %v806, %v814
        %v816 = vmul.f32 %v815, 1.442695
        %v817 = vpow.pop %v816
        %v818 = vsel %vm807, %v817, 0.0
        %v819 = vrot.slane %v818, 4
        %v820 = vadd.f32 %v818, %v819
        %v821 = vrot.slane %v820, 2
        %v822 = vadd.f32 %v820, %v821
        %v823 = vrot.slane %v822, 1
        %v824 = vadd.f32 %v822, %v823
        %v825 = vlog2.pop %v824
        %v826 = vmul.f32 %v825, 0.6931472
        %v827 = vsub.f32 %v815, %v826
        %828 = vst [vmem:[%s429] sm:$0x1f] %v827
        %s829 = sld [smem:[#allocation6 + %s439]]
        %v830 = vstv %s829
        %v831 = vmul.f32 %v830, %v803
        %832 = vst [vmem:[%s437] sm:$0x1f] %v831
        %p833 = scmp.lt.s32.totalorder %s30, 1
        %s834 = scalar_select %p833, %s30, 1
        %p835 = scmp.lt.s32.totalorder %s31, 2
        %s836 = scalar_select %p835, %s31, 2
        %s837 = smul.addr %s834, 3
        %s838 = sadd.s32 %s836, %s837
        %s839 = smul.addr %s838, 8
        %s840 = scalar_lea.vmem %s5, %s839
        %p841 = scmp.lt.s32.totalorder %s30, 1
        %s842 = scalar_select %p841, %s30, 1
        %p843 = scmp.lt.s32.totalorder %s31, 2
        %s844 = scalar_select %p843, %s31, 2
        %s845 = smul.addr %s842, 3
        %s846 = sadd.s32 %s844, %s845
        %s847 = smul.addr %s846, 8
        %s848 = scalar_lea.vmem %s6, %s847
        // Predicated region
        $region86: #{afford3d_forward.1} parent=72 // pred_check
          %p849 = pneg %p156
        $region87: #{afford3d_forward.1} parent=72 // pred_check_branch
          %851 = sbr.rel (%p849) target = $region89
        $region88: #{afford3d_forward.1} parent=72 // pred_region
          _
        $region89: #{afford3d_forward.1} parent=72 // pred_fallthru
          _
        // Predicated region
        $region90: #{afford3d_forward.1} parent=72 // pred_check
          %p852 = pneg %p184
        $region91: #{afford3d_forward.1} parent=72 // pred_check_branch
          %854 = sbr.rel (%p852) target = $region93
        $region92: #{afford3d_forward.1} parent=72 // pred_region
          _
        $region93: #{afford3d_forward.1} parent=72 // pred_fallthru
          _
      $region73: #{afford3d_forward.1} parent=5 // pred_fallthru
        _
      %p855 = scmp.le.s32.totalorder 2, %s21
      // Predicated region
      $region94: #{afford3d_forward.1} parent=5 // pred_check
        %p856 = pneg %p855
      $region95: #{afford3d_forward.1} parent=5 // pred_check_branch
        %858 = sbr.rel (%p856) target = $region97
      $region96: #{afford3d_forward.1} parent=5 // pred_region
        %s859 = ssub.s32 %s21, 2
        // Predicated region
        $region98: #{afford3d_forward.1} parent=96 // pred_check
          %p860 = pneg %p162
        $region99: #{afford3d_forward.1} parent=96 // pred_check_branch
          %862 = sbr.rel (%p860) target = $region101
        $region100: #{afford3d_forward.1} parent=96 // pred_region
          %p863 = scmp.lt.s32.totalorder %s32, 1
          %s864 = scalar_select %p863, %s32, 1
          %p865 = scmp.lt.s32.totalorder %s33, 2
          %s866 = scalar_select %p865, %s33, 2
          %s867 = smul.addr %s864, 3
          %s868 = sadd.s32 %s866, %s867
          %s869 = smul.addr %s868, 8
          %s870 = scalar_lea.vmem %s5, %s869
        $region101: #{afford3d_forward.1} parent=96 // pred_fallthru
          _
        // Predicated region
        $region102: #{afford3d_forward.1} parent=96 // pred_check
          %p871 = pneg %p190
        $region103: #{afford3d_forward.1} parent=96 // pred_check_branch
          %873 = sbr.rel (%p871) target = $region105
        $region104: #{afford3d_forward.1} parent=96 // pred_region
          %p874 = scmp.lt.s32.totalorder %s32, 1
          %s875 = scalar_select %p874, %s32, 1
          %p876 = scmp.lt.s32.totalorder %s33, 2
          %s877 = scalar_select %p876, %s33, 2
          %s878 = smul.addr %s875, 3
          %s879 = sadd.s32 %s877, %s878
          %s880 = smul.addr %s879, 8
          %s881 = scalar_lea.vmem %s6, %s880
        $region105: #{afford3d_forward.1} parent=96 // pred_fallthru
          _
      $region97: #{afford3d_forward.1} parent=5 // pred_fallthru
        _
    $region6: #{afford3d_forward.1} parent=1 // loop_footer
      %s25 = sadd.s32 1, %s21
    $region7: #{afford3d_forward.1} parent=1 // loop_footer_branch
      %20 = sbr.rel target = $region3
    $region8: #{afford3d_forward.1} parent=1 // loop_exit
      _
    %882 = vsyncpa [#allocation5], 1
    %s883 = scalar_lea.sflag [#allocation5], 1
    %884 = vsyncpa %s883, 1
    %885 = vsyncpa [#allocation7], 1

</llo_original>
